<compile_context>
chip_gen: v5e
topology: v5e:2x2
jax: 0.10.0
libtpu: 0.0.40
codegen_flags: <defaults>
</compile_context>

<pallas_src>
import functools
import numpy as np
import jax
import jax.numpy as jnp
from jax.experimental import pallas as pl
from jax.experimental.pallas import tpu as pltpu


# --------------------------- module "parameters" ----------------------------

def make_sinusoid_table(n_position: int, d_hid: int) -> jnp.ndarray:
    """Deterministic sinusoid position-encoding table, shape (1, n_position, d_hid)."""
    pos = np.arange(n_position, dtype=np.float64)[:, None]          # (P, 1)
    hid = np.arange(d_hid, dtype=np.float64)[None, :]               # (1, D)
    angle = pos / np.power(10000.0, 2.0 * (hid // 2) / d_hid)       # (P, D)
    table = np.empty_like(angle)
    table[:, 0::2] = np.sin(angle[:, 0::2])
    table[:, 1::2] = np.cos(angle[:, 1::2])
    return jnp.asarray(table[None, :, :], dtype=jnp.float32)        # (1, P, D)


def make_pos_row(pos_table: jnp.ndarray, input_type: str, x_shape, dtype) -> jnp.ndarray:
    """Precompute the flattened positional row ONCE (hoisted out of the hot path)."""
    if input_type in ("preceding_neighbors_vector", "max_prev_node_neighbors_vec"):
        _, S, M, D = x_shape
        pos = pos_table[0, :S, :].astype(dtype)                     # (S, D)
        return jnp.tile(pos[:, None, :], (1, M, 1)).reshape(1, S * M * D)
    elif input_type == "node_based":
        _, S, D = x_shape
        return pos_table[0, :S, :].astype(dtype).reshape(1, S * D)
    else:
        raise NotImplementedError(input_type)


# ------------------------------- Pallas kernel -------------------------------

def _broadcast_add_kernel(x_ref, pos_ref, o_ref):
    # x_ref / o_ref: (TB, TC); pos_ref: (1, TC) -> broadcast over sublanes.
    # Single VPU add; the kernel is HBM-DMA bound, no compute tricks needed.
    o_ref[...] = x_ref[...] + pos_ref[...]


def _sublane_multiple(dtype) -> int:
    # Minimum second-to-last block-dim multiple per dtype packing.
    return {4: 8, 2: 16, 1: 32}.get(jnp.dtype(dtype).itemsize, 8)


def _tiled_broadcast_add(x2d: jnp.ndarray, pos_row: jnp.ndarray) -> jnp.ndarray:
    """out[b, c] = x2d[b, c] + pos_row[0, c], tiled over both axes."""
    B, C = x2d.shape
    itemsize = jnp.dtype(x2d.dtype).itemsize
    sub = _sublane_multiple(x2d.dtype)

    # ~4 MiB x-blocks: DMA time dominates the ~0.35 us/step grid overhead on
    # every generation; with in/out double buffering (~4x block + pos) this
    # stays well inside the 64 MiB scoped-VMEM limit set below (safe v5e..v7x).
    target_bytes = 4 << 20

    # Prefer full-row blocks (one contiguous DMA per block, pos trivially
    # resident); fall back to 128-multiple column tiling only when a
    # minimal-sublane full row would blow the per-block budget.
    if sub * C * itemsize <= target_bytes:
        tc = C
    else:
        tc = max(128, ((target_bytes // (sub * itemsize)) // 128) * 128)

    tb = max(1, target_bytes // max(1, tc * itemsize))
    if tb >= B:
        tb = B                              # full dim -> always legal
    else:
        tb = max(sub, (tb // sub) * sub)    # dtype-aware sublane multiple
        tb = min(tb, B)

    # Megacore (v7x has 2 TensorCores): "parallel" only helps with >= 2 grid
    # steps.  If the grid would be a single block, split one axis when legal.
    if pl.cdiv(B, tb) * pl.cdiv(C, tc) < 2:
        if tc == C and C >= 256 and C % 128 == 0:
            tc = ((C // 2) // 128) * 128
        elif tb == B and B >= 2 * sub:
            tb = max(sub, ((B // 2) // sub) * sub)

    # Column (lane) axis outermost, batch (row) axis innermost: the pos block
    # index is constant across consecutive steps -> table stays in VMEM.
    grid = (pl.cdiv(C, tc), pl.cdiv(B, tb))

    return pl.pallas_call(
        _broadcast_add_kernel,
        out_shape=jax.ShapeDtypeStruct((B, C), x2d.dtype),
        grid=grid,
        in_specs=[
            pl.BlockSpec((tb, tc), lambda j, i: (i, j)),   # x
            pl.BlockSpec((1, tc), lambda j, i: (0, j)),    # pos (batch-invariant)
        ],
        out_specs=pl.BlockSpec((tb, tc), lambda j, i: (i, j)),
        input_output_aliases={0: 0},                       # in-place on x's buffer
        compiler_params=pltpu.CompilerParams(
            dimension_semantics=("parallel", "parallel"),
            vmem_limit_bytes=64 << 20),                    # keeps 4 MiB blocks legal on v5e
        cost_estimate=pl.CostEstimate(
            flops=B * C,
            transcendentals=0,
            bytes_accessed=(2 * B * C + C) * itemsize),
    )(x2d, pos_row)


# ------------------------------ Python wrapper ------------------------------

@functools.partial(jax.jit, static_argnames=("input_type",), donate_argnums=(0,))
def positional_encoding(x: jnp.ndarray, pos_row: jnp.ndarray, *, input_type: str) -> jnp.ndarray:
    """x + positional table (pos_row precomputed via make_pos_row); x is donated."""
    if input_type not in ("preceding_neighbors_vector",
                          "max_prev_node_neighbors_vec",
                          "node_based"):
        raise NotImplementedError(input_type)
    B = x.shape[0]
    row_width = int(np.prod(x.shape[1:]))
    assert pos_row.shape == (1, row_width), (pos_row.shape, x.shape)
    out2d = _tiled_broadcast_add(x.reshape(B, row_width), pos_row)
    return out2d.reshape(x.shape)


# ----------------------------------- main -----------------------------------

if __name__ == "__main__":
    key = jax.random.PRNGKey(0)
    k1, k2 = jax.random.split(key)

    # Module parameters (deterministic, built in-script — no checkpoint load).
    d_hid = 32
    n_position = 1000
    pos_table = make_sinusoid_table(n_position, d_hid)   # (1, 1000, 32)

    # Case 1: input_type = 'preceding_neighbors_vector'  -> x: (B, S, M, D)
    B, S, M = 2, 8, 4
    x4 = jax.random.normal(k1, (B, S, M, d_hid), dtype=jnp.float32)
    ref4 = x4 + pos_table[:, :S][:, :, None, :]          # reference BEFORE donation
    pos_row4 = make_pos_row(pos_table, "preceding_neighbors_vector", x4.shape, x4.dtype)
    out4 = positional_encoding(x4, pos_row4, input_type="preceding_neighbors_vector")
    out4 = jax.block_until_ready(out4)
    assert out4.shape == (B, S, M, d_hid)
    assert jnp.allclose(out4, ref4, atol=1e-6), "4D positional encoding mismatch"

    # Case 2: input_type = 'node_based'  -> x: (B, S, D)
    x3 = jax.random.normal(k2, (B, S, d_hid), dtype=jnp.float32)
    ref3 = x3 + pos_table[:, :S]                          # reference BEFORE donation
    pos_row3 = make_pos_row(pos_table, "node_based", x3.shape, x3.dtype)
    out3 = positional_encoding(x3, pos_row3, input_type="node_based")
    out3 = jax.block_until_ready(out3)
    assert out3.shape == (B, S, d_hid)
    assert jnp.allclose(out3, ref3, atol=1e-6), "3D positional encoding mismatch"

    print("KERNEL_OK")
</pallas_src>

<mosaic_0001>
module attributes {stable_mosaic.version = 11 : i64} {
  func.func @_broadcast_add_kernel(%arg0: i32, %arg1: i32, %arg2: memref<2x512xf32, #tpu.memory_space<vmem>>, %arg3: memref<1x512xf32, #tpu.memory_space<vmem>>, %arg4: memref<2x512xf32, #tpu.memory_space<vmem>>) attributes {dimension_semantics = [#tpu.dimension_semantics<parallel>, #tpu.dimension_semantics<parallel>], iteration_bounds = array<i64: 2, 1>, scalar_prefetch = 0 : i64, scratch_operands = 0 : i64, tpu.core_type = #tpu.core_type<tc>, window_params = [{transform_indices = @transform_0, window_bounds = array<i64: 2, 512>}, {transform_indices = @transform_1, window_bounds = array<i64: 1, 512>}, {transform_indices = @transform_2, window_bounds = array<i64: 2, 512>}]} {
    %c0 = arith.constant 0 : index
    %c0_0 = arith.constant 0 : index
    %0 = vector.load %arg2[%c0, %c0_0] : memref<2x512xf32, #tpu.memory_space<vmem>>, vector<2x512xf32>
    %c0_1 = arith.constant 0 : index
    %c0_2 = arith.constant 0 : index
    %1 = vector.load %arg3[%c0_1, %c0_2] : memref<1x512xf32, #tpu.memory_space<vmem>>, vector<1x512xf32>
    %2 = vector.broadcast %1 : vector<1x512xf32> to vector<2x512xf32>
    %3 = arith.addf %0, %2 : vector<2x512xf32>
    %c0_3 = arith.constant 0 : index
    %c0_4 = arith.constant 0 : index
    %4 = vector.load %arg4[%c0_3, %c0_4] : memref<2x512xf32, #tpu.memory_space<vmem>>, vector<2x512xf32>
    tpu.vector_store %arg4[%c0_3, %c0_4], %3 {strides = array<i32>} : memref<2x512xf32, #tpu.memory_space<vmem>>, vector<2x512xf32>,
    return
  }
  func.func @transform_0(%arg0: i32, %arg1: i32) -> (i32, i32) {
    %c0_i32 = arith.constant 0 : i32
    return %arg1, %arg0 : i32, i32
  }
  func.func @transform_1(%arg0: i32, %arg1: i32) -> (i32, i32) {
    %c0_i32 = arith.constant 0 : i32
    %c0_i32_0 = arith.constant 0 : i32
    return %c0_i32, %arg0 : i32, i32
  }
  func.func @transform_2(%arg0: i32, %arg1: i32) -> (i32, i32) {
    %c0_i32 = arith.constant 0 : i32
    return %arg1, %arg0 : i32, i32
  }
}

</mosaic_0001>

<llo_original>
// kernel: positional_encoding.1
$region0: #{positional_encoding.1}
  #allocation0 [shape = 'u32[]', space=smem, size = 0x4, offset = 0x4, fixed_abs, tag = 'smem constant byte address 0x4 - core index']
  #allocation1 [shape = 'u32[72,128]{1,0:T(1,128)}', space=vmem, size = 0x9000, scoped, tag = 'internal scratch']
  %s0 = inlined_call_operand.vmem [shape: f32[2,1024], index: 0, kind: input, shape index: {}, may-alias: {0,2}]
  %s1 = inlined_call_operand.vmem [shape: f32[1,1024], index: 1, kind: input, shape index: {}]
  %s2 = inlined_call_operand.vmem [shape: f32[2,1024], index: 2, kind: output, shape index: {}, may-alias: {0,2}]
  %s3 = sld [smem:[#allocation0]]
  $region41: #{positional_encoding.1} parent=0
    _
  %s5 = ssub.s32 1, %s3
  %s6 = scalar_select 0, %s5, %s3
  loop: start=0, step=1, limit=4
  $region2: #{positional_encoding.1} parent=0 // loop_pre_header
    _
  $region3: #{positional_encoding.1} parent=0 // loop_header
    %s8 = sphi 0, %s12
    %p9 = scmp.ge.s32.totalorder %s8, 4
    %s15 = sphi 0, %s27
    %s16 = sphi 0, %s23
    %s17 = sphi 0, %s15
    %s18 = sphi 0, %s16
    %s19 = sphi 0, %s17
    %s20 = sphi 0, %s18
    %s32 = sphi 0, %s34
    %s35 = sphi 0, %s32
    %s36 = sphi 0, %s35
    %s52 = sphi 0, %s36
    %s58 = sphi 0, %s60
    %s61 = sphi 0, %s58
    %s62 = sphi 0, %s61
    %s78 = sphi 0, %s62
    %s86 = sphi 0, %s88
    %s89 = sphi 0, %s86
    %s90 = sphi 0, %s89
    %s106 = sphi 0, %s90
  $region4: #{positional_encoding.1} parent=0 // loop_header_branch
    %11 = sbr.rel (%p9) target = $region8
  $region5: #{positional_encoding.1} parent=0 // loop_body
    %s13 = ssub.s32 %s8, 1
    %s14 = ssub.s32 %s8, 2
    %s21 = sadd.s32 1, %s16
    %p22 = scmp.ge.s32.totalorder %s21, 1
    %s23 = scalar_select %p22, 0, %s21
    %s24 = sadd.s32 1, %s15
    %s25 = scalar_select %p22, %s24, %s15
    %p26 = scmp.ge.s32.totalorder %s25, 2
    %s27 = scalar_select %p26, 0, %s25
    %s28 = ssub.s32 %s16, %s23
    %s29 = ssub.s32 %s15, %s27
    %s30 = sor.u32 %s28, %s29
    %p31 = scmp.eq.s32.totalorder %s30, 0
    %s33 = sadd.s32 %s32, 1
    %s34 = scalar_select %p31, %s32, %s33
    %p37 = pneg %p31
    %p38 = scmp.eq.s32.totalorder %s8, 1
    %p39 = por %p37, %p38
    %p40 = scmp.ne.s32.totalorder %s32, %s35
    %p41 = scmp.eq.s32.totalorder %s8, 0
    %p42 = por %p40, %p41
    %p43 = scmp.ne.s32.totalorder %s32, %s35
    %p44 = scmp.eq.s32.totalorder %s13, 1
    %p45 = por %p43, %p44
    %p46 = scmp.ne.s32.totalorder %s35, %s36
    %p47 = scmp.eq.s32.totalorder %s13, 0
    %p48 = por %p46, %p47
    %p49 = scmp.ne.s32.totalorder %s35, %s36
    %p50 = scmp.eq.s32.totalorder %s14, 1
    %p51 = por %p49, %p50
    %p53 = scmp.ne.s32.totalorder %s36, %s52
    %p54 = scmp.eq.s32.totalorder %s14, 0
    %p55 = por %p53, %p54
    %s56 = ssub.s32 %s15, %s27
    %p57 = scmp.eq.s32.totalorder %s56, 0
    %s59 = sadd.s32 %s58, 1
    %s60 = scalar_select %p57, %s58, %s59
    %p63 = pneg %p57
    %p64 = scmp.eq.s32.totalorder %s8, 1
    %p65 = por %p63, %p64
    %p66 = scmp.ne.s32.totalorder %s58, %s61
    %p67 = scmp.eq.s32.totalorder %s8, 0
    %p68 = por %p66, %p67
    %p69 = scmp.ne.s32.totalorder %s58, %s61
    %p70 = scmp.eq.s32.totalorder %s13, 1
    %p71 = por %p69, %p70
    %p72 = scmp.ne.s32.totalorder %s61, %s62
    %p73 = scmp.eq.s32.totalorder %s13, 0
    %p74 = por %p72, %p73
    %p75 = scmp.ne.s32.totalorder %s61, %s62
    %p76 = scmp.eq.s32.totalorder %s14, 1
    %p77 = por %p75, %p76
    %p79 = scmp.ne.s32.totalorder %s62, %s78
    %p80 = scmp.eq.s32.totalorder %s14, 0
    %p81 = por %p79, %p80
    %s82 = ssub.s32 %s16, %s23
    %s83 = ssub.s32 %s15, %s27
    %s84 = sor.u32 %s82, %s83
    %p85 = scmp.eq.s32.totalorder %s84, 0
    %s87 = sadd.s32 %s86, 1
    %s88 = scalar_select %p85, %s86, %s87
    %p91 = pneg %p85
    %p92 = scmp.eq.s32.totalorder %s8, 1
    %p93 = por %p91, %p92
    %p94 = scmp.ne.s32.totalorder %s86, %s89
    %p95 = scmp.eq.s32.totalorder %s8, 0
    %p96 = por %p94, %p95
    %p97 = scmp.ne.s32.totalorder %s86, %s89
    %p98 = scmp.eq.s32.totalorder %s13, 1
    %p99 = por %p97, %p98
    %p100 = scmp.ne.s32.totalorder %s89, %s90
    %p101 = scmp.eq.s32.totalorder %s13, 0
    %p102 = por %p100, %p101
    %p103 = scmp.ne.s32.totalorder %s89, %s90
    %p104 = scmp.eq.s32.totalorder %s14, 1
    %p105 = por %p103, %p104
    %p107 = scmp.ne.s32.totalorder %s90, %s106
    %p108 = scmp.eq.s32.totalorder %s14, 0
    %p109 = por %p107, %p108
    %p110 = scmp.le.s32.totalorder 1, %s8
    %p111 = scmp.lt.s32.totalorder %s8, 3
    %p112 = pnand %p110, %p111
    %p113 = pneg %p112
    // Predicated region
    $region9: #{positional_encoding.1} parent=5 // pred_check
      _
    $region10: #{positional_encoding.1} parent=5 // pred_check_branch
      %115 = sbr.rel (%p112) target = $region12
    $region11: #{positional_encoding.1} parent=5 // pred_region
      %s116 = ssub.s32 %s8, 1
    $region12: #{positional_encoding.1} parent=5 // pred_fallthru
      _
    %p117 = scmp.lt.s32.totalorder %s8, 2
    // Predicated region
    $region13: #{positional_encoding.1} parent=5 // pred_check
      %p118 = pneg %p117
    $region14: #{positional_encoding.1} parent=5 // pred_check_branch
      %120 = sbr.rel (%p118) target = $region16
    $region15: #{positional_encoding.1} parent=5 // pred_region
      // Predicated region
      $region17: #{positional_encoding.1} parent=15 // pred_check
        %p121 = pneg %p42
      $region18: #{positional_encoding.1} parent=15 // pred_check_branch
        %123 = sbr.rel (%p121) target = $region20
      $region19: #{positional_encoding.1} parent=15 // pred_region
        %s124 = smul.u32 4, %s15
        %p125 = scmp.lt.s32.totalorder %s16, 0
        %s126 = scalar_select %p125, %s16, 0
        %p127 = scmp.lt.s32.totalorder %s124, 7
        %s128 = scalar_select %p127, %s124, 7
        %s129 = smul.addr %s126, 8
        %s130 = sadd.s32 %s128, %s129
        %s131 = smul.addr %s130, 2
        %s132 = scalar_lea.vmem %s0, %s131
        %s133 = smul.u32 4, %s15
      $region20: #{positional_encoding.1} parent=15 // pred_fallthru
        _
      // Predicated region
      $region21: #{positional_encoding.1} parent=15 // pred_check
        %p134 = pneg %p68
      $region22: #{positional_encoding.1} parent=15 // pred_check_branch
        %136 = sbr.rel (%p134) target = $region24
      $region23: #{positional_encoding.1} parent=15 // pred_region
        %s137 = smul.u32 4, %s15
        %p138 = scmp.lt.s32.totalorder %s137, 7
        %s139 = scalar_select %p138, %s137, 7
        %s140 = scalar_lea.vmem %s1, %s139
        %s141 = smul.u32 4, %s15
      $region24: #{positional_encoding.1} parent=15 // pred_fallthru
        _
    $region16: #{positional_encoding.1} parent=5 // pred_fallthru
      _
    %p142 = scmp.le.s32.totalorder 1, %s8
    %p143 = scmp.lt.s32.totalorder %s8, 3
    %p144 = pnand %p142, %p143
    %p145 = pneg %p144
    // Predicated region
    $region25: #{positional_encoding.1} parent=5 // pred_check
      _
    $region26: #{positional_encoding.1} parent=5 // pred_check_branch
      %147 = sbr.rel (%p144) target = $region28
    $region27: #{positional_encoding.1} parent=5 // pred_region
      %s148 = ssub.s32 %s8, 1
      %s149 = smul.u32 4, %s17
      %p150 = scmp.lt.s32.totalorder %s18, 0
      %s151 = scalar_select %p150, %s18, 0
      %p152 = scmp.lt.s32.totalorder %s149, 7
      %s153 = scalar_select %p152, %s149, 7
      %s154 = smul.addr %s151, 8
      %s155 = sadd.s32 %s153, %s154
      %s156 = smul.addr %s155, 2
      %s157 = scalar_lea.vmem %s0, %s156
      %p158 = pneg %p48
      %p159 = pneg %p45
      %s160 = smul.u32 4, %s17
      %p161 = scmp.lt.s32.totalorder %s160, 7
      %s162 = scalar_select %p161, %s160, 7
      %s163 = scalar_lea.vmem %s1, %s162
      %p164 = pneg %p74
      %p165 = pneg %p71
      %p166 = pneg %p102
      %p167 = pneg %p99
      %s168 = smul.u32 4, %s17
      %p169 = scmp.lt.s32.totalorder %s18, 0
      %s170 = scalar_select %p169, %s18, 0
      %p171 = scmp.lt.s32.totalorder %s168, 7
      %s172 = scalar_select %p171, %s168, 7
      %s173 = smul.addr %s170, 8
      %s174 = sadd.s32 %s172, %s173
      %s175 = smul.addr %s174, 2
      %s176 = scalar_lea.vmem %s2, %s175
      %s177 = smul.u32 4, %s17
      %p178 = scmp.lt.s32.totalorder %s18, 0
      %s179 = scalar_select %p178, %s18, 0
      %p180 = scmp.lt.s32.totalorder %s177, 7
      %s181 = scalar_select %p180, %s177, 7
      %s182 = smul.addr %s179, 8
      %s183 = sadd.s32 %s181, %s182
      %s184 = smul.addr %s183, 2
      %s185 = scalar_lea.vmem %s0, %s184
      %s186 = smul.u32 4, %s17
      %s187 = smul.u32 4, %s17
      %p188 = scmp.lt.s32.totalorder %s187, 7
      %s189 = scalar_select %p188, %s187, 7
      %s190 = scalar_lea.vmem %s1, %s189
      %s191 = smul.u32 4, %s17
      %s192 = smul.u32 4, %s17
      %p193 = scmp.lt.s32.totalorder %s18, 0
      %s194 = scalar_select %p193, %s18, 0
      %p195 = scmp.lt.s32.totalorder %s192, 7
      %s196 = scalar_select %p195, %s192, 7
      %s197 = smul.addr %s194, 8
      %s198 = sadd.s32 %s196, %s197
      %s199 = smul.addr %s198, 2
      %s200 = scalar_lea.vmem %s2, %s199
      %s201 = smul.u32 4, %s17
      %v202 = vld [vmem:[%s185] sm:$0xff]
      %v203 = vld [vmem:[%s190] sm:$0xf]
      %v205 = vperm.slane %v203, 0
      %v206 = vperm.slane %v203, 1
      %v207 = vperm.slane %v203, 2
      %v208 = vperm.slane %v203, 3
      %v209 = vrot.slane %v206, 6
      %v210 = vrot.slane %v207, 4
      %v211 = vrot.slane %v208, 2
      %vm212 = vcmask 1041408
      %v213 = vsel %vm212, %v205, %v209
      %vm214 = vcmask 1045508
      %v215 = vsel %vm214, %v210, %v211
      %vm216 = vcmask 1043456
      %v217 = vsel %vm216, %v213, %v215
      %v219 = vadd.f32 %v202, %v217
      %220 = vst [vmem:[%s200] sm:$0xff] %v219
      %s221 = smul.u32 4, %s17
      %p222 = scmp.lt.s32.totalorder %s18, 0
      %s223 = scalar_select %p222, %s18, 0
      %p224 = scmp.lt.s32.totalorder %s221, 7
      %s225 = scalar_select %p224, %s221, 7
      %s226 = smul.addr %s223, 8
      %s227 = sadd.s32 %s225, %s226
      %s228 = smul.addr %s227, 2
      %s229 = scalar_lea.vmem %s2, %s228
      // Predicated region
      $region29: #{positional_encoding.1} parent=27 // pred_check
        %p230 = pneg %p99
      $region30: #{positional_encoding.1} parent=27 // pred_check_branch
        %232 = sbr.rel (%p230) target = $region32
      $region31: #{positional_encoding.1} parent=27 // pred_region
        %s233 = smul.u32 4, %s17
      $region32: #{positional_encoding.1} parent=27 // pred_fallthru
        _
    $region28: #{positional_encoding.1} parent=5 // pred_fallthru
      _
    %p234 = scmp.le.s32.totalorder 2, %s8
    // Predicated region
    $region33: #{positional_encoding.1} parent=5 // pred_check
      %p235 = pneg %p234
    $region34: #{positional_encoding.1} parent=5 // pred_check_branch
      %237 = sbr.rel (%p235) target = $region36
    $region35: #{positional_encoding.1} parent=5 // pred_region
      %s238 = ssub.s32 %s8, 2
      // Predicated region
      $region37: #{positional_encoding.1} parent=35 // pred_check
        %p239 = pneg %p105
      $region38: #{positional_encoding.1} parent=35 // pred_check_branch
        %241 = sbr.rel (%p239) target = $region40
      $region39: #{positional_encoding.1} parent=35 // pred_region
        %s242 = smul.u32 4, %s19
        %p243 = scmp.lt.s32.totalorder %s20, 0
        %s244 = scalar_select %p243, %s20, 0
        %p245 = scmp.lt.s32.totalorder %s242, 7
        %s246 = scalar_select %p245, %s242, 7
        %s247 = smul.addr %s244, 8
        %s248 = sadd.s32 %s246, %s247
        %s249 = smul.addr %s248, 2
        %s250 = scalar_lea.vmem %s2, %s249
      $region40: #{positional_encoding.1} parent=35 // pred_fallthru
        _
    $region36: #{positional_encoding.1} parent=5 // pred_fallthru
      _
  $region6: #{positional_encoding.1} parent=0 // loop_footer
    %s12 = sadd.s32 1, %s8
  $region7: #{positional_encoding.1} parent=0 // loop_footer_branch
    %7 = sbr.rel target = $region3
  $region8: #{positional_encoding.1} parent=0 // loop_exit
    _

</llo_original>
